<compile_context>
chip_gen: v7x
topology: tpu7x:2x2x1
jax: 0.10.0
libtpu: 0.0.40
codegen_flags: <defaults>
</compile_context>

<pallas_src>
import jax
import jax.numpy as jnp
import numpy as np
from jax.experimental import pallas as pl
from jax.experimental.pallas import tpu as pltpu


def _round_up(a, m):
    return ((a + m - 1) // m) * m


def _patch_embed_kernel(x_ref, w_ref, b_ref, o_ref):
    # x_ref: (C, Td, P)  -- per-channel patch rows; the DMA already split L -> (Td, P)
    # w_ref: (C, P, N)   -- resident weight, pre-permuted so w_ref[c,p,n] == W[n, p*C + c]
    # b_ref: (1, N) f32  -- resident bias
    # o_ref: (Td, N)
    n_chan = x_ref.shape[0]
    acc = jnp.zeros(o_ref.shape, dtype=jnp.float32)
    # n_chan (channels) is a small trace-time constant -> fully unrolled.
    # Each dot is a (Td, P) @ (P, N) MXU op with f32 accumulation; K = P stays
    # un-padded (the kernel is HBM-bound, so MXU slack is irrelevant).
    for c in range(n_chan):
        acc = acc + jnp.dot(x_ref[c], w_ref[c], preferred_element_type=jnp.float32)
    o_ref[...] = (acc + b_ref[...]).astype(o_ref.dtype)


def patch_embedding_pallas(x, weight, bias, patch_size, *, compute_dtype=None):
    """x: (B, C, L); weight: (dim_out, C*patch_size) torch layout; bias: (dim_out,)."""
    B, C, L = x.shape
    if L % patch_size != 0:
        raise Exception('Spectra dimensions must be divisible by the patch size!')
    P = patch_size
    d = L // P
    dim_out = weight.shape[0]
    assert weight.shape[1] == C * P, "weight must be (dim_out, channel*patch_size)"
    out_dtype = x.dtype
    cdt = compute_dtype if compute_dtype is not None else x.dtype

    # --- X: free view only (no transpose, no HBM round trip). ------------------
    x4 = x.reshape(B, C, d, P)                    # minor-dim split: zero-cost view
    if x4.dtype != np.dtype(cdt):
        # Elementwise cast; allow_input_fusion lets XLA fuse it into the kernel
        # operand read (unlike a transpose, a convert fuses cleanly).
        x4 = x4.astype(cdt)

    # --- W/bias: one-time tiny pre-permute so column order matches '(p c)'. ----
    # weight.T is (K, N) with row k = p*C + c  ->  (P, C, N) -> (C, P, N).
    w3 = jnp.transpose(weight.astype(cdt).T.reshape(P, C, dim_out), (1, 0, 2))
    b2 = bias.astype(jnp.float32).reshape(1, dim_out)

    # --- d-tile selection. ------------------------------------------------------
    # Td == d (full dim, always legal) or a multiple of 8 (legal partial block).
    Td = d if d <= 512 else 512
    if B == 1 and d > 16:
        # Guarantee >= 2 M tiles so v7x's two TensorCores both get work.
        half = _round_up(pl.cdiv(d, 2), 8)
        if half < Td:
            Td = half
    num_d_tiles = pl.cdiv(d, Td)
    grid = (B, num_d_tiles)

    # --- VMEM budget: account for lane/sublane padding of the narrow tiles. ----
    in_b = np.dtype(cdt).itemsize
    out_b = np.dtype(out_dtype).itemsize
    x_tile = C * _round_up(Td, 8) * _round_up(P, 128) * in_b          # P lane-pads to 128
    w_tile = C * _round_up(P, 8) * _round_up(dim_out, 128) * in_b
    b_tile = 8 * _round_up(dim_out, 128) * 4
    o_tile = _round_up(Td, 8) * _round_up(dim_out, 128) * out_b
    est = 2 * (x_tile + w_tile + b_tile + o_tile)                     # double-buffered
    vmem_limit = int(min(max(2 * est, 16 << 20), 48 << 20))           # stay < v7x 64 MiB

    out = pl.pallas_call(
        _patch_embed_kernel,
        out_shape=jax.ShapeDtypeStruct((B, d, dim_out), out_dtype),
        grid_spec=pltpu.PrefetchScalarGridSpec(
            num_scalar_prefetch=0,
            grid=grid,
            in_specs=[
                # X: (b, d-tile) -> (C, Td, P) tile; contiguous HBM read.
                pl.BlockSpec((None, C, Td, P), lambda b, dt: (b, 0, dt, 0)),
                # W: fully resident (constant block index -> fetched once).
                pl.BlockSpec((C, P, dim_out), lambda b, dt: (0, 0, 0)),
                # bias: fully resident.
                pl.BlockSpec((1, dim_out), lambda b, dt: (0, 0)),
            ],
            out_specs=pl.BlockSpec((None, Td, dim_out), lambda b, dt: (b, dt, 0)),
        ),
        compiler_params=pltpu.CompilerParams(
            dimension_semantics=("parallel", "parallel"),
            vmem_limit_bytes=vmem_limit,
            allow_input_fusion=[True, False, False],
        ),
    )(x4, w3, b2)
    return out


if __name__ == "__main__":
    def reference(x, weight, bias, P):
        B, C, L = x.shape
        d = L // P
        xr = jnp.transpose(x.reshape(B, C, d, P), (0, 2, 3, 1)).reshape(B, d, P * C)
        return xr @ weight.T + bias

    key = jax.random.PRNGKey(0)
    k1, k2, k3, k4 = jax.random.split(key, 4)

    # Case 1: spectra_size=16, patch_size=4, channel=4, dim_out=32.
    B, C, L, P, N = 2, 4, 16, 4, 32
    x = jax.random.normal(k1, (B, C, L), dtype=jnp.float32)
    w = jax.random.normal(k2, (N, C * P), dtype=jnp.float32) * 0.02
    b = jax.random.normal(k3, (N,), dtype=jnp.float32) * 0.02

    fn = jax.jit(lambda xx, ww, bb: patch_embedding_pallas(xx, ww, bb, P))
    y = jax.block_until_ready(fn(x, w, b))
    y_ref = reference(x, w, b, P)
    assert y.shape == (B, L // P, N) and y.dtype == x.dtype
    assert jnp.allclose(y, y_ref, atol=1e-4, rtol=1e-4)

    # bf16 compute path (halves X/W read traffic; f32 accumulate + bias + output).
    fn_bf16 = jax.jit(lambda xx, ww, bb: patch_embedding_pallas(
        xx, ww, bb, P, compute_dtype=jnp.bfloat16))
    y_bf16 = jax.block_until_ready(fn_bf16(x, w, b))
    assert y_bf16.shape == (B, L // P, N) and y_bf16.dtype == x.dtype
    assert jnp.allclose(y_bf16, y_ref, atol=2e-2, rtol=2e-2)

    # Case 2: module-default channel=1, larger spectra (exercises d-tiling / masked N stores).
    B2, C2, L2, P2, N2 = 2, 1, 1024, 8, 64
    x2 = jax.random.normal(k4, (B2, C2, L2), dtype=jnp.float32)
    w2 = jax.random.normal(k2, (N2, C2 * P2), dtype=jnp.float32) * 0.02
    b2 = jax.random.normal(k3, (N2,), dtype=jnp.float32) * 0.02
    fn2 = jax.jit(lambda xx, ww, bb: patch_embedding_pallas(xx, ww, bb, P2))
    y2 = jax.block_until_ready(fn2(x2, w2, b2))
    y2_ref = reference(x2, w2, b2, P2)
    assert y2.shape == (B2, L2 // P2, N2)
    assert jnp.allclose(y2, y2_ref, atol=1e-4, rtol=1e-4)

    print("KERNEL_OK")
</pallas_src>

<mosaic_0001>
module attributes {stable_mosaic.version = 11 : i64} {
  func.func @_patch_embed_kernel(%arg0: i32, %arg1: i32, %arg2: memref<1x4x4x4xf32, #tpu.memory_space<vmem>>, %arg3: memref<4x4x32xf32, #tpu.memory_space<vmem>>, %arg4: memref<1x32xf32, #tpu.memory_space<vmem>>, %arg5: memref<1x4x32xf32, #tpu.memory_space<vmem>>) attributes {dimension_semantics = [#tpu.dimension_semantics<parallel>, #tpu.dimension_semantics<parallel>], iteration_bounds = array<i64: 2, 1>, scalar_prefetch = 0 : i64, scratch_operands = 0 : i64, tpu.core_type = #tpu.core_type<tc>, window_params = [{transform_indices = @transform_0, window_bounds = array<i64: 1, 4, 4, 4>}, {pipeline_mode = #tpu.pipeline_mode<synchronous>, transform_indices = @transform_1, window_bounds = array<i64: 4, 4, 32>}, {pipeline_mode = #tpu.pipeline_mode<synchronous>, transform_indices = @transform_2, window_bounds = array<i64: 1, 32>}, {transform_indices = @transform_3, window_bounds = array<i64: 1, 4, 32>}]} {
    %cst = arith.constant 0.000000e+00 : f32
    %0 = vector.broadcast %cst : f32 to vector<4x32xf32>
    %c0 = arith.constant 0 : index
    %c0_0 = arith.constant 0 : index
    %c0_1 = arith.constant 0 : index
    %c0_2 = arith.constant 0 : index
    %1 = vector.load %arg2[%c0, %c0_0, %c0_1, %c0_2] : memref<1x4x4x4xf32, #tpu.memory_space<vmem>>, vector<1x1x4x4xf32>
    %2 = vector.shape_cast %1 : vector<1x1x4x4xf32> to vector<4x4xf32>
    %c0_3 = arith.constant 0 : index
    %c0_4 = arith.constant 0 : index
    %c0_5 = arith.constant 0 : index
    %3 = vector.load %arg3[%c0_3, %c0_4, %c0_5] : memref<4x4x32xf32, #tpu.memory_space<vmem>>, vector<1x4x32xf32>
    %4 = vector.shape_cast %3 : vector<1x4x32xf32> to vector<4x32xf32>
    %cst_6 = arith.constant dense<0.000000e+00> : vector<4x32xf32>
    %5 = tpu.matmul %2, %4, %cst_6 {dimension_numbers = #tpu.dot_dimension_numbers<[1], [0], [0], [1], [0, 0, 1, 1], [], []>} : vector<4x4xf32>, vector<4x32xf32>, vector<4x32xf32> -> vector<4x32xf32>
    %6 = arith.addf %0, %5 : vector<4x32xf32>
    %c0_7 = arith.constant 0 : index
    %c1 = arith.constant 1 : index
    %c0_8 = arith.constant 0 : index
    %c0_9 = arith.constant 0 : index
    %7 = vector.load %arg2[%c0_7, %c1, %c0_8, %c0_9] : memref<1x4x4x4xf32, #tpu.memory_space<vmem>>, vector<1x1x4x4xf32>
    %8 = vector.shape_cast %7 : vector<1x1x4x4xf32> to vector<4x4xf32>
    %c1_10 = arith.constant 1 : index
    %c0_11 = arith.constant 0 : index
    %c0_12 = arith.constant 0 : index
    %9 = vector.load %arg3[%c1_10, %c0_11, %c0_12] : memref<4x4x32xf32, #tpu.memory_space<vmem>>, vector<1x4x32xf32>
    %10 = vector.shape_cast %9 : vector<1x4x32xf32> to vector<4x32xf32>
    %cst_13 = arith.constant dense<0.000000e+00> : vector<4x32xf32>
    %11 = tpu.matmul %8, %10, %cst_13 {dimension_numbers = #tpu.dot_dimension_numbers<[1], [0], [0], [1], [0, 0, 1, 1], [], []>} : vector<4x4xf32>, vector<4x32xf32>, vector<4x32xf32> -> vector<4x32xf32>
    %12 = arith.addf %6, %11 : vector<4x32xf32>
    %c0_14 = arith.constant 0 : index
    %c2 = arith.constant 2 : index
    %c0_15 = arith.constant 0 : index
    %c0_16 = arith.constant 0 : index
    %13 = vector.load %arg2[%c0_14, %c2, %c0_15, %c0_16] : memref<1x4x4x4xf32, #tpu.memory_space<vmem>>, vector<1x1x4x4xf32>
    %14 = vector.shape_cast %13 : vector<1x1x4x4xf32> to vector<4x4xf32>
    %c2_17 = arith.constant 2 : index
    %c0_18 = arith.constant 0 : index
    %c0_19 = arith.constant 0 : index
    %15 = vector.load %arg3[%c2_17, %c0_18, %c0_19] : memref<4x4x32xf32, #tpu.memory_space<vmem>>, vector<1x4x32xf32>
    %16 = vector.shape_cast %15 : vector<1x4x32xf32> to vector<4x32xf32>
    %cst_20 = arith.constant dense<0.000000e+00> : vector<4x32xf32>
    %17 = tpu.matmul %14, %16, %cst_20 {dimension_numbers = #tpu.dot_dimension_numbers<[1], [0], [0], [1], [0, 0, 1, 1], [], []>} : vector<4x4xf32>, vector<4x32xf32>, vector<4x32xf32> -> vector<4x32xf32>
    %18 = arith.addf %12, %17 : vector<4x32xf32>
    %c0_21 = arith.constant 0 : index
    %c3 = arith.constant 3 : index
    %c0_22 = arith.constant 0 : index
    %c0_23 = arith.constant 0 : index
    %19 = vector.load %arg2[%c0_21, %c3, %c0_22, %c0_23] : memref<1x4x4x4xf32, #tpu.memory_space<vmem>>, vector<1x1x4x4xf32>
    %20 = vector.shape_cast %19 : vector<1x1x4x4xf32> to vector<4x4xf32>
    %c3_24 = arith.constant 3 : index
    %c0_25 = arith.constant 0 : index
    %c0_26 = arith.constant 0 : index
    %21 = vector.load %arg3[%c3_24, %c0_25, %c0_26] : memref<4x4x32xf32, #tpu.memory_space<vmem>>, vector<1x4x32xf32>
    %22 = vector.shape_cast %21 : vector<1x4x32xf32> to vector<4x32xf32>
    %cst_27 = arith.constant dense<0.000000e+00> : vector<4x32xf32>
    %23 = tpu.matmul %20, %22, %cst_27 {dimension_numbers = #tpu.dot_dimension_numbers<[1], [0], [0], [1], [0, 0, 1, 1], [], []>} : vector<4x4xf32>, vector<4x32xf32>, vector<4x32xf32> -> vector<4x32xf32>
    %24 = arith.addf %18, %23 : vector<4x32xf32>
    %c0_28 = arith.constant 0 : index
    %c0_29 = arith.constant 0 : index
    %25 = vector.load %arg4[%c0_28, %c0_29] : memref<1x32xf32, #tpu.memory_space<vmem>>, vector<1x32xf32>
    %26 = vector.broadcast %25 : vector<1x32xf32> to vector<4x32xf32>
    %27 = arith.addf %24, %26 : vector<4x32xf32>
    %c0_30 = arith.constant 0 : index
    %c0_31 = arith.constant 0 : index
    %c0_32 = arith.constant 0 : index
    %28 = vector.load %arg5[%c0_30, %c0_31, %c0_32] : memref<1x4x32xf32, #tpu.memory_space<vmem>>, vector<1x4x32xf32>
    %29 = vector.shape_cast %28 : vector<1x4x32xf32> to vector<4x32xf32>
    %30 = vector.shape_cast %27 : vector<4x32xf32> to vector<1x4x32xf32>
    tpu.vector_store %arg5[%c0_30, %c0_31, %c0_32], %30 {strides = array<i32>} : memref<1x4x32xf32, #tpu.memory_space<vmem>>, vector<1x4x32xf32>,
    return
  }
  func.func @transform_0(%arg0: i32, %arg1: i32) -> (i32, i32, i32, i32) {
    %c0_i32 = arith.constant 0 : i32
    %c0_i32_0 = arith.constant 0 : i32
    %c0_i32_1 = arith.constant 0 : i32
    return %arg0, %c0_i32, %arg1, %c0_i32_0 : i32, i32, i32, i32
  }
  func.func @transform_1(%arg0: i32, %arg1: i32) -> (i32, i32, i32) {
    %c0_i32 = arith.constant 0 : i32
    %c0_i32_0 = arith.constant 0 : i32
    %c0_i32_1 = arith.constant 0 : i32
    %c0_i32_2 = arith.constant 0 : i32
    return %c0_i32, %c0_i32_0, %c0_i32_1 : i32, i32, i32
  }
  func.func @transform_2(%arg0: i32, %arg1: i32) -> (i32, i32) {
    %c0_i32 = arith.constant 0 : i32
    %c0_i32_0 = arith.constant 0 : i32
    %c0_i32_1 = arith.constant 0 : i32
    return %c0_i32, %c0_i32_0 : i32, i32
  }
  func.func @transform_3(%arg0: i32, %arg1: i32) -> (i32, i32, i32) {
    %c0_i32 = arith.constant 0 : i32
    %c0_i32_0 = arith.constant 0 : i32
    return %arg0, %arg1, %c0_i32 : i32, i32, i32
  }
}

</mosaic_0001>

<llo_original>
// kernel: _lambda_.1
$region0: #{_lambda_.1}
  #allocation0 [shape = 'u32[]', space=smem, size = 0x4, offset = 0x4, fixed_abs, tag = 'smem constant byte address 0x4 - core index']
  #allocation1 [shape = 'u32[144,128]{1,0:T(1,128)}', space=vmem, size = 0x12000, scoped, tag = 'internal scratch']
  %s0 = inlined_call_operand.vmem [shape: f32[2,4,4,4], index: 0, kind: input, shape index: {}]
  %s1 = inlined_call_operand.vmem [shape: f32[4,4,32], index: 1, kind: input, shape index: {}]
  %s2 = inlined_call_operand.vmem [shape: f32[1,32], index: 2, kind: input, shape index: {}]
  %s3 = inlined_call_operand.hbm [shape: f32[2,4,32], index: 3, kind: output, shape index: {}]
  %s4 = sld [smem:[#allocation0]]
  $region45: #{_lambda_.1} parent=0
    _
  %s6 = ssub.s32 1, %s4
  %s7 = scalar_select 0, %s6, %s4
  $region1: #{_lambda_.1} parent=0
    #allocation2 [shape = 'u8[4096]{0}', space=vmem, size = 0x1000, scoped, tag = 'output window, operand 0']
    #allocation3 [shape = 's32[2]{0}', space=sflag, size = 0x8, scoped, tag = 'scoped memory for _lambda_.1']
    %8 = vsyncpa [#allocation3], 0
    %s9 = scalar_lea.sflag [#allocation3], 1
    %10 = vsyncpa %s9, 0
    loop: start=0, step=1, limit=4
    $region2: #{_lambda_.1} parent=1 // loop_pre_header
      _
    $region3: #{_lambda_.1} parent=1 // loop_header
      %s12 = sphi 0, %s16
      %p13 = scmp.ge.s32.totalorder %s12, 4
      %s19 = sphi 0, %s31
      %s20 = sphi 0, %s27
      %s21 = sphi 0, %s19
      %s22 = sphi 0, %s20
      %s23 = sphi 0, %s21
      %s24 = sphi 0, %s22
      %s36 = sphi 0, %s38
      %s39 = sphi 0, %s36
      %s40 = sphi 0, %s39
      %s56 = sphi 0, %s40
      %s60 = sphi 0, %s60
      %s62 = sphi 0, %s60
      %s63 = sphi 0, %s62
      %s77 = sphi 0, %s63
      %s81 = sphi 0, %s81
      %s83 = sphi 0, %s81
      %s84 = sphi 0, %s83
      %s98 = sphi 0, %s84
      %s106 = sphi 0, %s108
      %s109 = sphi 0, %s106
      %s110 = sphi 0, %s109
      %s126 = sphi 0, %s110
    $region4: #{_lambda_.1} parent=1 // loop_header_branch
      %15 = sbr.rel (%p13) target = $region8
    $region5: #{_lambda_.1} parent=1 // loop_body
      %s17 = ssub.s32 %s12, 1
      %s18 = ssub.s32 %s12, 2
      %s25 = sadd.s32 1, %s20
      %p26 = scmp.ge.s32.totalorder %s25, 1
      %s27 = scalar_select %p26, 0, %s25
      %s28 = sadd.s32 1, %s19
      %s29 = scalar_select %p26, %s28, %s19
      %p30 = scmp.ge.s32.totalorder %s29, 2
      %s31 = scalar_select %p30, 0, %s29
      %s32 = ssub.s32 %s19, %s31
      %s33 = ssub.s32 %s20, %s27
      %s34 = sor.u32 %s32, %s33
      %p35 = scmp.eq.s32.totalorder %s34, 0
      %s37 = sadd.s32 %s36, 1
      %s38 = scalar_select %p35, %s36, %s37
      %p41 = pneg %p35
      %p42 = scmp.eq.s32.totalorder %s12, 1
      %p43 = por %p41, %p42
      %p44 = scmp.ne.s32.totalorder %s36, %s39
      %p45 = scmp.eq.s32.totalorder %s12, 0
      %p46 = por %p44, %p45
      %p47 = scmp.ne.s32.totalorder %s36, %s39
      %p48 = scmp.eq.s32.totalorder %s17, 1
      %p49 = por %p47, %p48
      %p50 = scmp.ne.s32.totalorder %s39, %s40
      %p51 = scmp.eq.s32.totalorder %s17, 0
      %p52 = por %p50, %p51
      %p53 = scmp.ne.s32.totalorder %s39, %s40
      %p54 = scmp.eq.s32.totalorder %s18, 1
      %p55 = por %p53, %p54
      %p57 = scmp.ne.s32.totalorder %s40, %s56
      %p58 = scmp.eq.s32.totalorder %s18, 0
      %p59 = por %p57, %p58
      %s61 = sadd.s32 %s60, 1
      %p64 = scmp.eq.s32.totalorder %s12, 1
      %p65 = scmp.ne.s32.totalorder %s60, %s62
      %p66 = scmp.eq.s32.totalorder %s12, 0
      %p67 = por %p65, %p66
      %p68 = scmp.ne.s32.totalorder %s60, %s62
      %p69 = scmp.eq.s32.totalorder %s17, 1
      %p70 = por %p68, %p69
      %p71 = scmp.ne.s32.totalorder %s62, %s63
      %p72 = scmp.eq.s32.totalorder %s17, 0
      %p73 = por %p71, %p72
      %p74 = scmp.ne.s32.totalorder %s62, %s63
      %p75 = scmp.eq.s32.totalorder %s18, 1
      %p76 = por %p74, %p75
      %p78 = scmp.ne.s32.totalorder %s63, %s77
      %p79 = scmp.eq.s32.totalorder %s18, 0
      %p80 = por %p78, %p79
      %s82 = sadd.s32 %s81, 1
      %p85 = scmp.eq.s32.totalorder %s12, 1
      %p86 = scmp.ne.s32.totalorder %s81, %s83
      %p87 = scmp.eq.s32.totalorder %s12, 0
      %p88 = por %p86, %p87
      %p89 = scmp.ne.s32.totalorder %s81, %s83
      %p90 = scmp.eq.s32.totalorder %s17, 1
      %p91 = por %p89, %p90
      %p92 = scmp.ne.s32.totalorder %s83, %s84
      %p93 = scmp.eq.s32.totalorder %s17, 0
      %p94 = por %p92, %p93
      %p95 = scmp.ne.s32.totalorder %s83, %s84
      %p96 = scmp.eq.s32.totalorder %s18, 1
      %p97 = por %p95, %p96
      %p99 = scmp.ne.s32.totalorder %s84, %s98
      %p100 = scmp.eq.s32.totalorder %s18, 0
      %p101 = por %p99, %p100
      %s102 = ssub.s32 %s19, %s31
      %s103 = ssub.s32 %s20, %s27
      %s104 = sor.u32 %s102, %s103
      %p105 = scmp.eq.s32.totalorder %s104, 0
      %s107 = sadd.s32 %s106, 1
      %s108 = scalar_select %p105, %s106, %s107
      %p111 = pneg %p105
      %p112 = scmp.eq.s32.totalorder %s12, 1
      %p113 = por %p111, %p112
      %p114 = scmp.ne.s32.totalorder %s106, %s109
      %p115 = scmp.eq.s32.totalorder %s12, 0
      %p116 = por %p114, %p115
      %p117 = scmp.ne.s32.totalorder %s106, %s109
      %p118 = scmp.eq.s32.totalorder %s17, 1
      %p119 = por %p117, %p118
      %p120 = scmp.ne.s32.totalorder %s109, %s110
      %p121 = scmp.eq.s32.totalorder %s17, 0
      %p122 = por %p120, %p121
      %p123 = scmp.ne.s32.totalorder %s109, %s110
      %p124 = scmp.eq.s32.totalorder %s18, 1
      %p125 = por %p123, %p124
      %p127 = scmp.ne.s32.totalorder %s110, %s126
      %p128 = scmp.eq.s32.totalorder %s18, 0
      %p129 = por %p127, %p128
      %p130 = scmp.le.s32.totalorder 1, %s12
      %p131 = scmp.lt.s32.totalorder %s12, 3
      %p132 = pnand %p130, %p131
      %p133 = pneg %p132
      // Predicated region
      $region9: #{_lambda_.1} parent=5 // pred_check
        _
      $region10: #{_lambda_.1} parent=5 // pred_check_branch
        %135 = sbr.rel (%p132) target = $region12
      $region11: #{_lambda_.1} parent=5 // pred_region
        %s136 = ssub.s32 %s12, 1
        // Predicated region
        $region13: #{_lambda_.1} parent=11 // pred_check
          %p137 = pneg %p73
        $region14: #{_lambda_.1} parent=11 // pred_check_branch
          %139 = sbr.rel (%p137) target = $region16
        $region15: #{_lambda_.1} parent=11 // pred_region
          _
        $region16: #{_lambda_.1} parent=11 // pred_fallthru
          _
        // Predicated region
        $region17: #{_lambda_.1} parent=11 // pred_check
          %p140 = pneg %p94
        $region18: #{_lambda_.1} parent=11 // pred_check_branch
          %142 = sbr.rel (%p140) target = $region20
        $region19: #{_lambda_.1} parent=11 // pred_region
          _
        $region20: #{_lambda_.1} parent=11 // pred_fallthru
          _
      $region12: #{_lambda_.1} parent=5 // pred_fallthru
        _
      %p143 = scmp.lt.s32.totalorder %s12, 2
      // Predicated region
      $region21: #{_lambda_.1} parent=5 // pred_check
        %p144 = pneg %p143
      $region22: #{_lambda_.1} parent=5 // pred_check_branch
        %146 = sbr.rel (%p144) target = $region24
      $region23: #{_lambda_.1} parent=5 // pred_region
        // Predicated region
        $region25: #{_lambda_.1} parent=23 // pred_check
          %p147 = pneg %p46
        $region26: #{_lambda_.1} parent=23 // pred_check_branch
          %149 = sbr.rel (%p147) target = $region28
        $region27: #{_lambda_.1} parent=23 // pred_region
          %p150 = scmp.lt.s32.totalorder %s19, 1
          %s151 = scalar_select %p150, %s19, 1
          %p152 = scmp.lt.s32.totalorder %s20, 0
          %s153 = scalar_select %p152, %s20, 0
          %s154 = smul.addr %s151, 4
          %s155 = sadd.s32 %s153, %s154
          %s156 = smul.addr %s155, 4
          %s157 = scalar_lea.vmem %s0, %s156
        $region28: #{_lambda_.1} parent=23 // pred_fallthru
          _
      $region24: #{_lambda_.1} parent=5 // pred_fallthru
        _
      %p158 = scmp.le.s32.totalorder 1, %s12
      %p159 = scmp.lt.s32.totalorder %s12, 3
      %p160 = pnand %p158, %p159
      %p161 = pneg %p160
      // Predicated region
      $region29: #{_lambda_.1} parent=5 // pred_check
        _
      $region30: #{_lambda_.1} parent=5 // pred_check_branch
        %163 = sbr.rel (%p160) target = $region32
      $region31: #{_lambda_.1} parent=5 // pred_region
        %s164 = ssub.s32 %s12, 1
        %p165 = scmp.lt.s32.totalorder %s21, 1
        %s166 = scalar_select %p165, %s21, 1
        %p167 = scmp.lt.s32.totalorder %s22, 0
        %s168 = scalar_select %p167, %s22, 0
        %s169 = smul.addr %s166, 4
        %s170 = sadd.s32 %s168, %s169
        %s171 = smul.addr %s170, 4
        %s172 = scalar_lea.vmem %s0, %s171
        %p173 = pneg %p52
        %p174 = pneg %p49
        %p175 = pneg %p73
        %p176 = pneg %p70
        %p177 = pneg %p94
        %p178 = pneg %p91
        %p179 = pneg %p122
        %p180 = pneg %p119
        %s181 = sand.u32 %s109, 1
        %s182 = scalar_lea.sflag [#allocation3], %s181
        %s183 = sand.u32 %s109, 1
        %s184 = smul.addr %s183, 4
        %s185 = scalar_lea.vmem [#allocation2], %s184
        %p186 = scmp.lt.s32.totalorder %s21, 1
        %s187 = scalar_select %p186, %s21, 1
        %p188 = scmp.lt.s32.totalorder %s22, 0
        %s189 = scalar_select %p188, %s22, 0
        %s190 = smul.addr %s187, 4
        %s191 = sadd.s32 %s189, %s190
        %s192 = smul.addr %s191, 4
        %s193 = scalar_lea.vmem %s0, %s192
        %v194 = vld [vmem:[%s193] sm:$0xf]
        %v195 = vld [vmem:[%s1] sm:$0xf]
        %s196 = scalar_lea.vmem %s193, 4
        %v197 = vld [vmem:[%s196] sm:$0xf]
        %s198 = scalar_lea.vmem %s1, 4
        %v199 = vld [vmem:[%s198] sm:$0xf]
        %vm200 = vcmask 31744
        %v202 = vsel %vm200, %v197, 0
        %vm204 = vcmask 1043456
        %v206 = vsel %vm204, %v199, 0
        %208 = vmatprep.subr.mxu0 0.0
        %209 = vmatpush1.msra.mxu0 %v206
        %210 = vmatprep.subr.mxu0 0.0
        %211 = vmatpush1.msra.mxu0 0.0
        %212 = vmatprep.subr.mxu0 0.0
        %213 = vmatpush1.msra.mxu0 0.0
        %214 = vmatprep.subr.mxu0 0.0
        %215 = vmatpush1.msra.mxu0 0.0
        %216 = vmatprep.subr.mxu0 0.0
        %217 = vmatpush1.msra.mxu0 0.0
        %218 = vmatprep.subr.mxu0 0.0
        %219 = vmatpush1.msra.mxu0 0.0
        %220 = vmatprep.subr.mxu0 0.0
        %221 = vmatpush1.msra.mxu0 0.0
        %222 = vmatprep.subr.mxu0 0.0
        %223 = vmatpush1.msra.mxu0 0.0
        %224 = vmatprep.subr.mxu0 0.0
        %225 = vmatpush1.msra.mxu0 0.0
        %226 = vmatprep.subr.mxu0 0.0
        %227 = vmatpush1.msra.mxu0 0.0
        %228 = vmatprep.subr.mxu0 0.0
        %229 = vmatpush1.msra.mxu0 0.0
        %230 = vmatprep.subr.mxu0 0.0
        %231 = vmatpush1.msra.mxu0 0.0
        %232 = vmatprep.subr.mxu0 0.0
        %233 = vmatpush1.msra.mxu0 0.0
        %234 = vmatprep.subr.mxu0 0.0
        %235 = vmatpush1.msra.mxu0 0.0
        %236 = vmatprep.subr.mxu0 0.0
        %237 = vmatpush1.msra.mxu0 0.0
        %238 = vmatprep.subr.mxu0 0.0
        %239 = vmatpush1.msra.mxu0 0.0
        %240 = vmatprep.subr.mxu0 0.0
        %241 = vmatpush1.msra.mxu0 0.0
        %242 = vmatprep.subr.mxu0 0.0
        %243 = vmatpush1.msra.mxu0 0.0
        %244 = vmatprep.subr.mxu0 0.0
        %245 = vmatpush1.msra.mxu0 0.0
        %246 = vmatprep.subr.mxu0 0.0
        %247 = vmatpush1.msra.mxu0 0.0
        %248 = vmatprep.subr.mxu0 0.0
        %249 = vmatpush1.msra.mxu0 0.0
        %250 = vmatprep.subr.mxu0 0.0
        %251 = vmatpush1.msra.mxu0 0.0
        %252 = vmatprep.subr.mxu0 0.0
        %253 = vmatpush1.msra.mxu0 0.0
        %254 = vmatprep.subr.mxu0 0.0
        %255 = vmatpush1.msra.mxu0 0.0
        %256 = vmatprep.subr.mxu0 0.0
        %257 = vmatpush1.msra.mxu0 0.0
        %258 = vmatprep.subr.mxu0 0.0
        %259 = vmatpush1.msra.mxu0 0.0
        %260 = vmatprep.subr.mxu0 0.0
        %261 = vmatpush1.msra.mxu0 0.0
        %262 = vmatprep.subr.mxu0 0.0
        %263 = vmatpush1.msra.mxu0 0.0
        %264 = vmatprep.subr.mxu0 0.0
        %265 = vmatpush1.msra.mxu0 0.0
        %266 = vmatprep.subr.mxu0 0.0
        %267 = vmatpush1.msra.mxu0 0.0
        %268 = vmatprep.subr.mxu0 0.0
        %269 = vmatpush1.msra.mxu0 0.0
        %270 = vmatprep.subr.mxu0 0.0
        %271 = vmatpush1.msra.mxu0 0.0
        %272 = vmatprep.mubr.f32.mxu0 0.0
        %273 = vmatmul.mubr.f32.gmra.mrb[0].mxu0 %v202
        %v274 = vpop.f32.mrb[0].mxu0
        %v275 = vadd.f32 0.0, %v274
        %v276 = vpop.f32.mrb[0].mxu0
        %277 = vdwg.mxu0
        %v279 = vsel %vm200, %v194, 0
        %v282 = vsel %vm204, %v195, 0
        %284 = vmatprep.subr.mxu0 0.0
        %285 = vmatpush1.msra.mxu0 %v282
        %286 = vmatprep.subr.mxu0 0.0
        %287 = vmatpush1.msra.mxu0 0.0
        %288 = vmatprep.subr.mxu0 0.0
        %289 = vmatpush1.msra.mxu0 0.0
        %290 = vmatprep.subr.mxu0 0.0
        %291 = vmatpush1.msra.mxu0 0.0
        %292 = vmatprep.subr.mxu0 0.0
        %293 = vmatpush1.msra.mxu0 0.0
        %294 = vmatprep.subr.mxu0 0.0
        %295 = vmatpush1.msra.mxu0 0.0
        %296 = vmatprep.subr.mxu0 0.0
        %297 = vmatpush1.msra.mxu0 0.0
        %298 = vmatprep.subr.mxu0 0.0
        %299 = vmatpush1.msra.mxu0 0.0
        %300 = vmatprep.subr.mxu0 0.0
        %301 = vmatpush1.msra.mxu0 0.0
        %302 = vmatprep.subr.mxu0 0.0
        %303 = vmatpush1.msra.mxu0 0.0
        %304 = vmatprep.subr.mxu0 0.0
        %305 = vmatpush1.msra.mxu0 0.0
        %306 = vmatprep.subr.mxu0 0.0
        %307 = vmatpush1.msra.mxu0 0.0
        %308 = vmatprep.subr.mxu0 0.0
        %309 = vmatpush1.msra.mxu0 0.0
        %310 = vmatprep.subr.mxu0 0.0
        %311 = vmatpush1.msra.mxu0 0.0
        %312 = vmatprep.subr.mxu0 0.0
        %313 = vmatpush1.msra.mxu0 0.0
        %314 = vmatprep.subr.mxu0 0.0
        %315 = vmatpush1.msra.mxu0 0.0
        %316 = vmatprep.subr.mxu0 0.0
        %317 = vmatpush1.msra.mxu0 0.0
        %318 = vmatprep.subr.mxu0 0.0
        %319 = vmatpush1.msra.mxu0 0.0
        %320 = vmatprep.subr.mxu0 0.0
        %321 = vmatpush1.msra.mxu0 0.0
        %322 = vmatprep.subr.mxu0 0.0
        %323 = vmatpush1.msra.mxu0 0.0
        %324 = vmatprep.subr.mxu0 0.0
        %325 = vmatpush1.msra.mxu0 0.0
        %326 = vmatprep.subr.mxu0 0.0
        %327 = vmatpush1.msra.mxu0 0.0
        %328 = vmatprep.subr.mxu0 0.0
        %329 = vmatpush1.msra.mxu0 0.0
        %330 = vmatprep.subr.mxu0 0.0
        %331 = vmatpush1.msra.mxu0 0.0
        %332 = vmatprep.subr.mxu0 0.0
        %333 = vmatpush1.msra.mxu0 0.0
        %334 = vmatprep.subr.mxu0 0.0
        %335 = vmatpush1.msra.mxu0 0.0
        %336 = vmatprep.subr.mxu0 0.0
        %337 = vmatpush1.msra.mxu0 0.0
        %338 = vmatprep.subr.mxu0 0.0
        %339 = vmatpush1.msra.mxu0 0.0
        %340 = vmatprep.subr.mxu0 0.0
        %341 = vmatpush1.msra.mxu0 0.0
        %342 = vmatprep.subr.mxu0 0.0
        %343 = vmatpush1.msra.mxu0 0.0
        %344 = vmatprep.subr.mxu0 0.0
        %345 = vmatpush1.msra.mxu0 0.0
        %346 = vmatprep.subr.mxu0 0.0
        %347 = vmatpush1.msra.mxu0 0.0
        %348 = vmatprep.mubr.f32.mxu0 0.0
        %349 = vmatmul.mubr.f32.gmra.mrb[0].mxu0 %v279
        %v350 = vpop.f32.mrb[0].mxu0
        %v351 = vadd.f32 %v275, %v350
        %v352 = vpop.f32.mrb[0].mxu0
        %353 = vdwg.mxu0
        %s354 = scalar_lea.vmem %s193, 8
        %v355 = vld [vmem:[%s354] sm:$0xf]
        %s356 = scalar_lea.vmem %s1, 8
        %v357 = vld [vmem:[%s356] sm:$0xf]
        %v359 = vsel %vm200, %v355, 0
        %v362 = vsel %vm204, %v357, 0
        %364 = vmatprep.subr.mxu0 0.0
        %365 = vmatpush1.msra.mxu0 %v362
        %366 = vmatprep.subr.mxu0 0.0
        %367 = vmatpush1.msra.mxu0 0.0
        %368 = vmatprep.subr.mxu0 0.0
        %369 = vmatpush1.msra.mxu0 0.0
        %370 = vmatprep.subr.mxu0 0.0
        %371 = vmatpush1.msra.mxu0 0.0
        %372 = vmatprep.subr.mxu0 0.0
        %373 = vmatpush1.msra.mxu0 0.0
        %374 = vmatprep.subr.mxu0 0.0
        %375 = vmatpush1.msra.mxu0 0.0
        %376 = vmatprep.subr.mxu0 0.0
        %377 = vmatpush1.msra.mxu0 0.0
        %378 = vmatprep.subr.mxu0 0.0
        %379 = vmatpush1.msra.mxu0 0.0
        %380 = vmatprep.subr.mxu0 0.0
        %381 = vmatpush1.msra.mxu0 0.0
        %382 = vmatprep.subr.mxu0 0.0
        %383 = vmatpush1.msra.mxu0 0.0
        %384 = vmatprep.subr.mxu0 0.0
        %385 = vmatpush1.msra.mxu0 0.0
        %386 = vmatprep.subr.mxu0 0.0
        %387 = vmatpush1.msra.mxu0 0.0
        %388 = vmatprep.subr.mxu0 0.0
        %389 = vmatpush1.msra.mxu0 0.0
        %390 = vmatprep.subr.mxu0 0.0
        %391 = vmatpush1.msra.mxu0 0.0
        %392 = vmatprep.subr.mxu0 0.0
        %393 = vmatpush1.msra.mxu0 0.0
        %394 = vmatprep.subr.mxu0 0.0
        %395 = vmatpush1.msra.mxu0 0.0
        %396 = vmatprep.subr.mxu0 0.0
        %397 = vmatpush1.msra.mxu0 0.0
        %398 = vmatprep.subr.mxu0 0.0
        %399 = vmatpush1.msra.mxu0 0.0
        %400 = vmatprep.subr.mxu0 0.0
        %401 = vmatpush1.msra.mxu0 0.0
        %402 = vmatprep.subr.mxu0 0.0
        %403 = vmatpush1.msra.mxu0 0.0
        %404 = vmatprep.subr.mxu0 0.0
        %405 = vmatpush1.msra.mxu0 0.0
        %406 = vmatprep.subr.mxu0 0.0
        %407 = vmatpush1.msra.mxu0 0.0
        %408 = vmatprep.subr.mxu0 0.0
        %409 = vmatpush1.msra.mxu0 0.0
        %410 = vmatprep.subr.mxu0 0.0
        %411 = vmatpush1.msra.mxu0 0.0
        %412 = vmatprep.subr.mxu0 0.0
        %413 = vmatpush1.msra.mxu0 0.0
        %414 = vmatprep.subr.mxu0 0.0
        %415 = vmatpush1.msra.mxu0 0.0
        %416 = vmatprep.subr.mxu0 0.0
        %417 = vmatpush1.msra.mxu0 0.0
        %418 = vmatprep.subr.mxu0 0.0
        %419 = vmatpush1.msra.mxu0 0.0
        %420 = vmatprep.subr.mxu0 0.0
        %421 = vmatpush1.msra.mxu0 0.0
        %422 = vmatprep.subr.mxu0 0.0
        %423 = vmatpush1.msra.mxu0 0.0
        %424 = vmatprep.subr.mxu0 0.0
        %425 = vmatpush1.msra.mxu0 0.0
        %426 = vmatprep.subr.mxu0 0.0
        %427 = vmatpush1.msra.mxu0 0.0
        %428 = vmatprep.mubr.f32.mxu0 0.0
        %429 = vmatmul.mubr.f32.gmra.mrb[0].mxu0 %v359
        %v430 = vpop.f32.mrb[0].mxu0
        %v431 = vadd.f32 0.0, %v430
        %v432 = vpop.f32.mrb[0].mxu0
        %433 = vdwg.mxu0
        %v434 = vadd.f32 %v351, %v431
        %s435 = scalar_lea.vmem %s193, 12
        %v436 = vld [vmem:[%s435] sm:$0xf]
        %s437 = scalar_lea.vmem %s1, 12
        %v438 = vld [vmem:[%s437] sm:$0xf]
        %v440 = vsel %vm200, %v436, 0
        %v443 = vsel %vm204, %v438, 0
        %445 = vmatprep.subr.mxu0 0.0
        %446 = vmatpush1.msra.mxu0 %v443
        %447 = vmatprep.subr.mxu0 0.0
        %448 = vmatpush1.msra.mxu0 0.0
        %449 = vmatprep.subr.mxu0 0.0
        %450 = vmatpush1.msra.mxu0 0.0
        %451 = vmatprep.subr.mxu0 0.0
        %452 = vmatpush1.msra.mxu0 0.0
        %453 = vmatprep.subr.mxu0 0.0
        %454 = vmatpush1.msra.mxu0 0.0
        %455 = vmatprep.subr.mxu0 0.0
        %456 = vmatpush1.msra.mxu0 0.0
        %457 = vmatprep.subr.mxu0 0.0
        %458 = vmatpush1.msra.mxu0 0.0
        %459 = vmatprep.subr.mxu0 0.0
        %460 = vmatpush1.msra.mxu0 0.0
        %461 = vmatprep.subr.mxu0 0.0
        %462 = vmatpush1.msra.mxu0 0.0
        %463 = vmatprep.subr.mxu0 0.0
        %464 = vmatpush1.msra.mxu0 0.0
        %465 = vmatprep.subr.mxu0 0.0
        %466 = vmatpush1.msra.mxu0 0.0
        %467 = vmatprep.subr.mxu0 0.0
        %468 = vmatpush1.msra.mxu0 0.0
        %469 = vmatprep.subr.mxu0 0.0
        %470 = vmatpush1.msra.mxu0 0.0
        %471 = vmatprep.subr.mxu0 0.0
        %472 = vmatpush1.msra.mxu0 0.0
        %473 = vmatprep.subr.mxu0 0.0
        %474 = vmatpush1.msra.mxu0 0.0
        %475 = vmatprep.subr.mxu0 0.0
        %476 = vmatpush1.msra.mxu0 0.0
        %477 = vmatprep.subr.mxu0 0.0
        %478 = vmatpush1.msra.mxu0 0.0
        %479 = vmatprep.subr.mxu0 0.0
        %480 = vmatpush1.msra.mxu0 0.0
        %481 = vmatprep.subr.mxu0 0.0
        %482 = vmatpush1.msra.mxu0 0.0
        %483 = vmatprep.subr.mxu0 0.0
        %484 = vmatpush1.msra.mxu0 0.0
        %485 = vmatprep.subr.mxu0 0.0
        %486 = vmatpush1.msra.mxu0 0.0
        %487 = vmatprep.subr.mxu0 0.0
        %488 = vmatpush1.msra.mxu0 0.0
        %489 = vmatprep.subr.mxu0 0.0
        %490 = vmatpush1.msra.mxu0 0.0
        %491 = vmatprep.subr.mxu0 0.0
        %492 = vmatpush1.msra.mxu0 0.0
        %493 = vmatprep.subr.mxu0 0.0
        %494 = vmatpush1.msra.mxu0 0.0
        %495 = vmatprep.subr.mxu0 0.0
        %496 = vmatpush1.msra.mxu0 0.0
        %497 = vmatprep.subr.mxu0 0.0
        %498 = vmatpush1.msra.mxu0 0.0
        %499 = vmatprep.subr.mxu0 0.0
        %500 = vmatpush1.msra.mxu0 0.0
        %501 = vmatprep.subr.mxu0 0.0
        %502 = vmatpush1.msra.mxu0 0.0
        %503 = vmatprep.subr.mxu0 0.0
        %504 = vmatpush1.msra.mxu0 0.0
        %505 = vmatprep.subr.mxu0 0.0
        %506 = vmatpush1.msra.mxu0 0.0
        %507 = vmatprep.subr.mxu0 0.0
        %508 = vmatpush1.msra.mxu0 0.0
        %509 = vmatprep.mubr.f32.mxu0 0.0
        %510 = vmatmul.mubr.f32.gmra.mrb[0].mxu0 %v440
        %v511 = vpop.f32.mrb[0].mxu0
        %v512 = vadd.f32 0.0, %v511
        %v513 = vpop.f32.mrb[0].mxu0
        %514 = vdwg.mxu0
        %v515 = vadd.f32 %v434, %v512
        %v516 = vld [vmem:[%s2] sm:$0x1]
        %v518 = vlaneseq
        %v519 = vshrl.u32 %v518, 7
        %v520 = vsub.s32 0, %v519
        %v521 = vrot.slane %v516, %v520
        %v523 = vadd.f32 %v515, %v521
        %vm524 = vcmask 257024
        %525 = vst.msk [vmem:[%s185] sm:$0xf] %vm524, %v523
        %s526 = sand.u32 %s109, 1
        %s527 = scalar_lea.sflag [#allocation3], %s526
        %s528 = sand.u32 %s109, 1
        %s529 = smul.addr %s528, 4
        %s530 = scalar_lea.vmem [#allocation2], %s529
        // Predicated region
        $region33: #{_lambda_.1} parent=31 // pred_check
          %p531 = pneg %p119
        $region34: #{_lambda_.1} parent=31 // pred_check_branch
          %533 = sbr.rel (%p531) target = $region36
        $region35: #{_lambda_.1} parent=31 // pred_region
          %s535 = ssub.s32 64, 64
          %536 = vsyncadd %s527, %s535
          %s537 = sadd.s32 %s22, %s21
          %s538 = smul.addr %s537, 64
          %s539 = scalar_lea.hbm %s3, %s538
          %s541 = sshll.u32 %s530, 4
          %s542 = int_to_ptr.vmem [resolvable:$true] %s541
          %544 = dma.vmem_to_hbm [thread:$0]  %s542, 64, %s539, %s527
        $region36: #{_lambda_.1} parent=31 // pred_fallthru
          _
      $region32: #{_lambda_.1} parent=5 // pred_fallthru
        _
      %p545 = scmp.le.s32.totalorder 2, %s12
      // Predicated region
      $region37: #{_lambda_.1} parent=5 // pred_check
        %p546 = pneg %p545
      $region38: #{_lambda_.1} parent=5 // pred_check_branch
        %548 = sbr.rel (%p546) target = $region40
      $region39: #{_lambda_.1} parent=5 // pred_region
        %s549 = ssub.s32 %s12, 2
        // Predicated region
        $region41: #{_lambda_.1} parent=39 // pred_check
          %p550 = pneg %p125
        $region42: #{_lambda_.1} parent=39 // pred_check_branch
          %552 = sbr.rel (%p550) target = $region44
        $region43: #{_lambda_.1} parent=39 // pred_region
          %s553 = sand.u32 %s110, 1
          %s554 = scalar_lea.sflag [#allocation3], %s553
          %s555 = sand.u32 %s110, 1
          %s556 = smul.addr %s555, 4
          %s557 = scalar_lea.vmem [#allocation2], %s556
          %558 = dma.done %s554, 64
        $region44: #{_lambda_.1} parent=39 // pred_fallthru
          _
      $region40: #{_lambda_.1} parent=5 // pred_fallthru
        _
    $region6: #{_lambda_.1} parent=1 // loop_footer
      %s16 = sadd.s32 1, %s12
    $region7: #{_lambda_.1} parent=1 // loop_footer_branch
      %11 = sbr.rel target = $region3
    $region8: #{_lambda_.1} parent=1 // loop_exit
      _
    %559 = vsyncpa [#allocation3], 1
    %s560 = scalar_lea.sflag [#allocation3], 1
    %561 = vsyncpa %s560, 1

</llo_original>
